<compile_context>
chip_gen: v5e
topology: v5e:2x2
jax: 0.10.0
libtpu: 0.0.40
codegen_flags: <defaults>
</compile_context>

<pallas_src>
import jax
import jax.numpy as jnp
from jax.experimental import pallas as pl
from jax.experimental.pallas import tpu as pltpu


MASK_PARAM = 24
N_MELS = 64
assert MASK_PARAM < N_MELS, "FrequencyMasking parameter should be less than num mels"

FBLK = 8  # frequency rows per block (sublane multiple)


def _freq_mask_band_kernel(se_ref, x_ref, o_ref):
    # se_ref: SMEM int32[3] = [mask_start, mask_end, window_start_block]
    # x_ref / o_ref: VMEM tile of shape (tb, C, FBLK, T); o aliases x's HBM buffer.
    start = se_ref[0]
    end = se_ref[1]
    f0 = (se_ref[2] + pl.program_id(1)) * FBLK  # global freq index of this block's row 0
    f_idx = f0 + jax.lax.broadcasted_iota(jnp.int32, (1, 1, FBLK, 1), 2)
    in_band = (f_idx >= start) & (f_idx < end)
    # broadcast the (1,1,FBLK,1) predicate across batch/channel/time; scalar 0.0 fill
    o_ref[...] = jnp.where(in_band, 0.0, x_ref[...])


def frequency_masking(spec: jax.Array, key: jax.Array, mask_param: int = MASK_PARAM) -> jax.Array:
    """torchaudio-style FrequencyMasking on spec of shape (B, C, F, T).

    NOTE: the spec buffer is aliased into the output (donated) — do not reuse it.
    """
    B, C, F, T = spec.shape

    # Number of 8-row blocks needed to cover any band of length <= mask_param-1
    # starting at an arbitrary (un-aligned by up to 7 rows) position.
    num_fblks = (mask_param - 1 + 2 * (FBLK - 1)) // FBLK
    band = num_fblks * FBLK
    assert F % FBLK == 0 and band <= F, (
        "frequency axis must be a multiple of 8 and >= the padded mask band"
    )

    # --- random mask band (scalar glue, mirrors torchaudio.functional.mask_along_axis) ---
    k1, k2 = jax.random.split(key)
    value = jax.random.uniform(k1, (), jnp.float32) * mask_param
    min_value = jax.random.uniform(k2, (), jnp.float32) * (F - value)
    mask_start = jnp.floor(min_value).astype(jnp.int32)
    mask_end = mask_start + jnp.floor(value).astype(jnp.int32)
    # 8-aligned window start (as a block index), clamped so the window stays inside [0, F)
    window_blk = jnp.minimum(mask_start // FBLK, (F - band) // FBLK)
    scalars = jnp.stack([mask_start, mask_end, window_blk]).astype(jnp.int32)

    # Batch tile: largest divisor of B keeping each (tb, C, FBLK, T) block ~<= 2 MiB.
    bytes_per_b = C * FBLK * T * spec.dtype.itemsize
    cap = max(1, min(B, (2 * 1024 * 1024) // max(1, bytes_per_b)))
    tb = next(d for d in range(cap, 0, -1) if B % d == 0)

    blk = (tb, C, FBLK, T)
    idx_map = lambda b, j, se: (b, 0, se[2] + j, 0)  # dynamic F block from prefetched scalar

    grid_spec = pltpu.PrefetchScalarGridSpec(
        num_scalar_prefetch=1,
        grid=(B // tb, num_fblks),
        in_specs=[pl.BlockSpec(blk, idx_map)],
        out_specs=pl.BlockSpec(blk, idx_map),
    )

    return pl.pallas_call(
        _freq_mask_band_kernel,
        out_shape=jax.ShapeDtypeStruct(spec.shape, spec.dtype),
        grid_spec=grid_spec,
        # args are (scalars, spec) -> alias spec (input index 1, counting the prefetch arg)
        # with output 0; untouched frequency rows then keep their input values.
        input_output_aliases={1: 0},
        compiler_params=pltpu.CompilerParams(
            dimension_semantics=("parallel", "parallel")
        ),
    )(scalars, spec)


if __name__ == "__main__":
    key = jax.random.PRNGKey(0)
    k_spec, k_mask = jax.random.split(key)

    # (batch, channel, n_mels, time) — n_mels=64 per module default, lane-dense time=128
    B, C, F, T = 2, 4, N_MELS, 128
    spec = jax.random.normal(k_spec, (B, C, F, T), dtype=jnp.float32)

    # Reference computed BEFORE the kernel call (the kernel aliases/donates `spec`).
    k1, k2 = jax.random.split(k_mask)
    value = jax.random.uniform(k1, (), jnp.float32) * MASK_PARAM
    min_value = jax.random.uniform(k2, (), jnp.float32) * (F - value)
    s = jnp.floor(min_value).astype(jnp.int32)
    e = s + jnp.floor(value).astype(jnp.int32)
    f_idx = jnp.arange(F)[None, None, :, None]
    ref = jnp.where((f_idx >= s) & (f_idx < e), 0.0, spec)
    ref = jax.block_until_ready(ref)

    out = frequency_masking(spec, k_mask, mask_param=MASK_PARAM)
    out = jax.block_until_ready(out)

    assert out.shape == (B, C, F, T)
    assert jnp.allclose(out, ref), "mismatch vs reference"

    print("KERNEL_OK")
</pallas_src>

<mosaic_0001>
module attributes {stable_mosaic.version = 11 : i64} {
  func.func @_freq_mask_band_kernel(%arg0: i32, %arg1: i32, %arg2: memref<3xi32, #tpu.memory_space<smem>>, %arg3: memref<2x4x8x128xf32, #tpu.memory_space<vmem>>, %arg4: memref<2x4x8x128xf32, #tpu.memory_space<vmem>>) attributes {dimension_semantics = [#tpu.dimension_semantics<parallel>, #tpu.dimension_semantics<parallel>], iteration_bounds = array<i64: 1, 4>, scalar_prefetch = 1 : i64, scratch_operands = 0 : i64, tpu.core_type = #tpu.core_type<tc>, window_params = [{transform_indices = @transform_0, window_bounds = array<i64: 2, 4, 8, 128>}, {transform_indices = @transform_1, window_bounds = array<i64: 2, 4, 8, 128>}]} {
    %c0 = arith.constant 0 : index
    %0 = memref.load %arg2[%c0] : memref<3xi32, #tpu.memory_space<smem>>
    %c1 = arith.constant 1 : index
    %1 = memref.load %arg2[%c1] : memref<3xi32, #tpu.memory_space<smem>>
    %c2 = arith.constant 2 : index
    %2 = memref.load %arg2[%c2] : memref<3xi32, #tpu.memory_space<smem>>
    %3 = arith.addi %2, %arg1 : i32
    %c8_i32 = arith.constant 8 : i32
    %4 = arith.muli %3, %c8_i32 : i32
    %5 = tpu.iota {dimensions = array<i32: 2>} : vector<1x1x8x1xi32>
    %6 = vector.broadcast %4 : i32 to vector<1x1x8x1xi32>
    %7 = arith.addi %6, %5 : vector<1x1x8x1xi32>
    %8 = vector.broadcast %0 : i32 to vector<1x1x8x1xi32>
    %9 = arith.cmpi sge, %7, %8 : vector<1x1x8x1xi32>
    %10 = vector.broadcast %1 : i32 to vector<1x1x8x1xi32>
    %11 = arith.cmpi slt, %7, %10 : vector<1x1x8x1xi32>
    %12 = arith.andi %9, %11 : vector<1x1x8x1xi1>
    %c0_0 = arith.constant 0 : index
    %c0_1 = arith.constant 0 : index
    %c0_2 = arith.constant 0 : index
    %c0_3 = arith.constant 0 : index
    %13 = vector.load %arg3[%c0_0, %c0_1, %c0_2, %c0_3] : memref<2x4x8x128xf32, #tpu.memory_space<vmem>>, vector<2x4x8x128xf32>
    %cst = arith.constant 0.000000e+00 : f32
    %14 = vector.shape_cast %12 : vector<1x1x8x1xi1> to vector<1x1x8x1xi1>
    %15 = vector.broadcast %14 : vector<1x1x8x1xi1> to vector<2x4x8x128xi1>
    %16 = vector.broadcast %cst : f32 to vector<2x4x8x128xf32>
    %17 = arith.select %15, %16, %13 : vector<2x4x8x128xi1>, vector<2x4x8x128xf32>
    %c0_4 = arith.constant 0 : index
    %c0_5 = arith.constant 0 : index
    %c0_6 = arith.constant 0 : index
    %c0_7 = arith.constant 0 : index
    %18 = vector.load %arg4[%c0_4, %c0_5, %c0_6, %c0_7] : memref<2x4x8x128xf32, #tpu.memory_space<vmem>>, vector<2x4x8x128xf32>
    tpu.vector_store %arg4[%c0_4, %c0_5, %c0_6, %c0_7], %17 {strides = array<i32>} : memref<2x4x8x128xf32, #tpu.memory_space<vmem>>, vector<2x4x8x128xf32>,
    return
  }
  func.func @transform_0(%arg0: i32, %arg1: i32, %arg2: memref<3xi32, #tpu.memory_space<smem>>) -> (i32, i32, i32, i32) {
    %c2 = arith.constant 2 : index
    %0 = memref.load %arg2[%c2] : memref<3xi32, #tpu.memory_space<smem>>
    %1 = arith.addi %0, %arg1 : i32
    %c0_i32 = arith.constant 0 : i32
    %c0_i32_0 = arith.constant 0 : i32
    %c0_i32_1 = arith.constant 0 : i32
    return %arg0, %c0_i32, %1, %c0_i32_0 : i32, i32, i32, i32
  }
  func.func @transform_1(%arg0: i32, %arg1: i32, %arg2: memref<3xi32, #tpu.memory_space<smem>>) -> (i32, i32, i32, i32) {
    %c2 = arith.constant 2 : index
    %0 = memref.load %arg2[%c2] : memref<3xi32, #tpu.memory_space<smem>>
    %1 = arith.addi %0, %arg1 : i32
    %c0_i32 = arith.constant 0 : i32
    %c0_i32_0 = arith.constant 0 : i32
    %c0_i32_1 = arith.constant 0 : i32
    return %arg0, %c0_i32, %1, %c0_i32_0 : i32, i32, i32, i32
  }
}

</mosaic_0001>

<llo_original>
// kernel: tpu_custom_call.1
$region0: #{tpu_custom_call.1}
  #allocation0 [shape = 'u32[]', space=smem, size = 0x4, offset = 0x4, fixed_abs, tag = 'smem constant byte address 0x4 - core index']
  #allocation1 [shape = 'u32[72,128]{1,0:T(1,128)}', space=vmem, size = 0x9000, scoped, tag = 'internal scratch']
  #allocation2 [shape = 's32[1]{0}', space=sflag, size = 0x4, scoped, tag = 'scoped memory for tpu_custom_call.1']
  #allocation3 [shape = 'u8[512]{0}', space=smem, size = 0x200, scoped, tag = 'prefetched SMEM operand 0']
  %s0 = inlined_call_operand.vmem [shape: s32[3], index: 0, kind: input, shape index: {}]
  %s1 = inlined_call_operand.hbm [shape: f32[2,4,64,128], index: 1, kind: input, shape index: {}, may-alias: {1,2}]
  %s2 = inlined_call_operand.hbm [shape: f32[2,4,64,128], index: 2, kind: output, shape index: {}, may-alias: {1,2}]
  %s3 = sld [smem:[#allocation0]]
  $region41: #{tpu_custom_call.1} parent=0
    _
  %s5 = ssub.s32 1, %s3
  %s6 = scalar_select 0, %s5, %s3
  %s8 = sshll.u32 %s0, 4
  %s9 = int_to_ptr.vmem [resolvable:$true] %s8
  %11 = dma.vmem_to_smem %s9, 16, [#allocation3], [#allocation2]
  %13 = dma.done [#allocation2], 16
  %14 = sfence
  $region1: #{tpu_custom_call.1} parent=0
    #allocation4 [shape = 'u8[65536]{0}', space=vmem, size = 0x10000, scoped, tag = 'input window, operand 1']
    #allocation5 [shape = 's32[2]{0}', space=sflag, size = 0x8, scoped, tag = 'scoped memory for tpu_custom_call.1']
    #allocation6 [shape = 's32[2]{0}', space=sflag, size = 0x8, scoped, tag = 'scoped memory for tpu_custom_call.1']
    #allocation7 [shape = 'u8[65536]{0}', space=vmem, size = 0x10000, scoped, tag = 'output window, operand 0']
    %15 = vsyncpa [#allocation5], 0
    %s16 = scalar_lea.sflag [#allocation5], 1
    %17 = vsyncpa %s16, 0
    %18 = vsyncpa [#allocation6], 0
    %s19 = scalar_lea.sflag [#allocation6], 1
    %20 = vsyncpa %s19, 0
    loop: start=0, step=1, limit=6
    $region2: #{tpu_custom_call.1} parent=1 // loop_pre_header
      _
    $region3: #{tpu_custom_call.1} parent=1 // loop_header
      %s22 = sphi 0, %s26
      %p23 = scmp.ge.s32.totalorder %s22, 6
      %s29 = sphi 0, %s41
      %s30 = sphi 0, %s37
      %s31 = sphi 0, %s29
      %s32 = sphi 0, %s30
      %s33 = sphi 0, %s31
      %s34 = sphi 0, %s32
      %s50 = sphi 0, %s52
      %s53 = sphi 0, %s50
      %s54 = sphi 0, %s53
      %s70 = sphi 0, %s54
      %s82 = sphi 0, %s84
      %s85 = sphi 0, %s82
      %s86 = sphi 0, %s85
      %s102 = sphi 0, %s86
    $region4: #{tpu_custom_call.1} parent=1 // loop_header_branch
      %25 = sbr.rel (%p23) target = $region8
    $region5: #{tpu_custom_call.1} parent=1 // loop_body
      %s27 = ssub.s32 %s22, 1
      %s28 = ssub.s32 %s22, 2
      %s35 = sadd.s32 1, %s30
      %p36 = scmp.ge.s32.totalorder %s35, 4
      %s37 = scalar_select %p36, 0, %s35
      %s38 = sadd.s32 1, %s29
      %s39 = scalar_select %p36, %s38, %s29
      %p40 = scmp.ge.s32.totalorder %s39, 1
      %s41 = scalar_select %p40, 0, %s39
      %s42 = sld [smem:[#allocation3 + $0x2]]
      %s43 = sadd.s32 %s42, %s30
      %s44 = sld [smem:[#allocation3 + $0x2]]
      %s45 = sadd.s32 %s44, %s37
      %s46 = ssub.s32 %s29, %s41
      %s47 = ssub.s32 %s43, %s45
      %s48 = sor.u32 %s46, %s47
      %p49 = scmp.eq.s32.totalorder %s48, 0
      %s51 = sadd.s32 %s50, 1
      %s52 = scalar_select %p49, %s50, %s51
      %p55 = pneg %p49
      %p56 = scmp.eq.s32.totalorder %s22, 3
      %p57 = por %p55, %p56
      %p58 = scmp.ne.s32.totalorder %s50, %s53
      %p59 = scmp.eq.s32.totalorder %s22, 0
      %p60 = por %p58, %p59
      %p61 = scmp.ne.s32.totalorder %s50, %s53
      %p62 = scmp.eq.s32.totalorder %s27, 3
      %p63 = por %p61, %p62
      %p64 = scmp.ne.s32.totalorder %s53, %s54
      %p65 = scmp.eq.s32.totalorder %s27, 0
      %p66 = por %p64, %p65
      %p67 = scmp.ne.s32.totalorder %s53, %s54
      %p68 = scmp.eq.s32.totalorder %s28, 3
      %p69 = por %p67, %p68
      %p71 = scmp.ne.s32.totalorder %s54, %s70
      %p72 = scmp.eq.s32.totalorder %s28, 0
      %p73 = por %p71, %p72
      %s74 = sld [smem:[#allocation3 + $0x2]]
      %s75 = sadd.s32 %s74, %s30
      %s76 = sld [smem:[#allocation3 + $0x2]]
      %s77 = sadd.s32 %s76, %s37
      %s78 = ssub.s32 %s29, %s41
      %s79 = ssub.s32 %s75, %s77
      %s80 = sor.u32 %s78, %s79
      %p81 = scmp.eq.s32.totalorder %s80, 0
      %s83 = sadd.s32 %s82, 1
      %s84 = scalar_select %p81, %s82, %s83
      %p87 = pneg %p81
      %p88 = scmp.eq.s32.totalorder %s22, 3
      %p89 = por %p87, %p88
      %p90 = scmp.ne.s32.totalorder %s82, %s85
      %p91 = scmp.eq.s32.totalorder %s22, 0
      %p92 = por %p90, %p91
      %p93 = scmp.ne.s32.totalorder %s82, %s85
      %p94 = scmp.eq.s32.totalorder %s27, 3
      %p95 = por %p93, %p94
      %p96 = scmp.ne.s32.totalorder %s85, %s86
      %p97 = scmp.eq.s32.totalorder %s27, 0
      %p98 = por %p96, %p97
      %p99 = scmp.ne.s32.totalorder %s85, %s86
      %p100 = scmp.eq.s32.totalorder %s28, 3
      %p101 = por %p99, %p100
      %p103 = scmp.ne.s32.totalorder %s86, %s102
      %p104 = scmp.eq.s32.totalorder %s28, 0
      %p105 = por %p103, %p104
      %p106 = scmp.le.s32.totalorder 1, %s22
      %p107 = scmp.lt.s32.totalorder %s22, 5
      %p108 = pnand %p106, %p107
      %p109 = pneg %p108
      // Predicated region
      $region9: #{tpu_custom_call.1} parent=5 // pred_check
        _
      $region10: #{tpu_custom_call.1} parent=5 // pred_check_branch
        %111 = sbr.rel (%p108) target = $region12
      $region11: #{tpu_custom_call.1} parent=5 // pred_region
        %s112 = ssub.s32 %s22, 1
      $region12: #{tpu_custom_call.1} parent=5 // pred_fallthru
        _
      %p113 = scmp.lt.s32.totalorder %s22, 4
      // Predicated region
      $region13: #{tpu_custom_call.1} parent=5 // pred_check
        %p114 = pneg %p113
      $region14: #{tpu_custom_call.1} parent=5 // pred_check_branch
        %116 = sbr.rel (%p114) target = $region16
      $region15: #{tpu_custom_call.1} parent=5 // pred_region
        // Predicated region
        $region17: #{tpu_custom_call.1} parent=15 // pred_check
          %p117 = pneg %p60
        $region18: #{tpu_custom_call.1} parent=15 // pred_check_branch
          %119 = sbr.rel (%p117) target = $region20
        $region19: #{tpu_custom_call.1} parent=15 // pred_region
          %s120 = sand.u32 %s50, 1
          %s121 = scalar_lea.sflag [#allocation5], %s120
          %s122 = sand.u32 %s50, 1
          %s123 = smul.addr %s122, 64
          %s124 = scalar_lea.vmem [#allocation4], %s123
          %s125 = sld [smem:[#allocation3 + $0x2]]
          %s126 = sadd.s32 %s125, %s30
          %s127 = smul.u32 2, %s29
          %129 = vsyncadd %s121, 0
          %s130 = smul.addr %s127, 32
          %s131 = sadd.s32 %s126, %s130
          %s132 = smul.addr %s131, 8
          %s133 = scalar_lea.hbm %s1, %s132
          %s134 = sshll.u32 %s133, 4
          %s135 = int_to_ptr.hbm [resolvable:$true] %s134
          %s136 = sshll.u32 %s124, 4
          %s137 = int_to_ptr.vmem [resolvable:$true] %s136
          %142 = dma.hbm_to_vmem [thread:$0]  %s135, 1024, %s137, %s121, 1024, 128, 8
        $region20: #{tpu_custom_call.1} parent=15 // pred_fallthru
          _
      $region16: #{tpu_custom_call.1} parent=5 // pred_fallthru
        _
      %p143 = scmp.le.s32.totalorder 1, %s22
      %p144 = scmp.lt.s32.totalorder %s22, 5
      %p145 = pnand %p143, %p144
      %p146 = pneg %p145
      // Predicated region
      $region21: #{tpu_custom_call.1} parent=5 // pred_check
        _
      $region22: #{tpu_custom_call.1} parent=5 // pred_check_branch
        %148 = sbr.rel (%p145) target = $region24
      $region23: #{tpu_custom_call.1} parent=5 // pred_region
        %s149 = ssub.s32 %s22, 1
        %s150 = sand.u32 %s53, 1
        %s151 = scalar_lea.sflag [#allocation5], %s150
        %s152 = sand.u32 %s53, 1
        %s153 = smul.addr %s152, 64
        %s154 = scalar_lea.vmem [#allocation4], %s153
        // Predicated region
        $region25: #{tpu_custom_call.1} parent=23 // pred_check
          %p155 = pneg %p66
        $region26: #{tpu_custom_call.1} parent=23 // pred_check_branch
          %157 = sbr.rel (%p155) target = $region28
        $region27: #{tpu_custom_call.1} parent=23 // pred_region
          %159 = dma.done %s151, 1024
        $region28: #{tpu_custom_call.1} parent=23 // pred_fallthru
          _
        %s160 = sand.u32 %s53, 1
        %s161 = scalar_lea.sflag [#allocation5], %s160
        %s162 = sand.u32 %s53, 1
        %s163 = smul.addr %s162, 64
        %s164 = scalar_lea.vmem [#allocation4], %s163
        %p165 = pneg %p66
        %p166 = pneg %p63
        %p167 = pneg %p98
        %p168 = pneg %p95
        %s169 = sand.u32 %s85, 1
        %s170 = scalar_lea.sflag [#allocation6], %s169
        %s171 = sand.u32 %s85, 1
        %s172 = smul.addr %s171, 64
        %s173 = scalar_lea.vmem [#allocation7], %s172
        %s174 = sld [smem:[#allocation3 + $0x2]]
        %s175 = sadd.s32 %s174, %s32
        %s176 = smul.u32 2, %s31
        %s177 = sld [smem:[#allocation3 + $0x2]]
        %s178 = sadd.s32 %s177, %s32
        %s179 = smul.u32 2, %s31
        %s180 = sld [smem:[#allocation3]]
        %s181 = sld [smem:[#allocation3 + $0x1]]
        %s182 = sld [smem:[#allocation3 + $0x2]]
        %s183 = sadd.s32 %s182, %s32
        %s184 = smul.u32 %s183, 8
        %v185 = vlaneseq
        %v186 = vshrl.u32 %v185, 7
        %v187 = vstv %s184
        %v188 = vadd.s32 %v187, %v186
        %v189 = vstv %s180
        %vm190 = vcmp.ge.s32.totalorder %v188, %v189
        %v191 = vstv %s181
        %vm192 = vcmp.lt.s32.totalorder %v188, %v191
        %vm193 = vmand %vm190, %vm192
        %v194 = vld [vmem:[%s154] sm:$0xff]
        %v195 = vld [vmem:[%s154 + $0x8] sm:$0xff]
        %v196 = vld [vmem:[%s154 + $0x10] sm:$0xff]
        %v197 = vld [vmem:[%s154 + $0x18] sm:$0xff]
        %v198 = vld [vmem:[%s154 + $0x20] sm:$0xff]
        %v199 = vld [vmem:[%s154 + $0x28] sm:$0xff]
        %v200 = vld [vmem:[%s154 + $0x30] sm:$0xff]
        %v201 = vld [vmem:[%s154 + $0x38] sm:$0xff]
        %v202 = vsel %vm193, 1, 0
        %vm203 = vcmp.eq.s32.totalorder %v202, 1
        %v204 = vsel %vm203, 0.0, %v194
        %v205 = vsel %vm203, 0.0, %v195
        %v206 = vsel %vm203, 0.0, %v196
        %v207 = vsel %vm203, 0.0, %v197
        %v208 = vsel %vm203, 0.0, %v198
        %v209 = vsel %vm203, 0.0, %v199
        %v210 = vsel %vm203, 0.0, %v200
        %v211 = vsel %vm203, 0.0, %v201
        %212 = vst [vmem:[%s173] sm:$0xff] %v204
        %213 = vst [vmem:[%s173 + $0x8] sm:$0xff] %v205
        %214 = vst [vmem:[%s173 + $0x10] sm:$0xff] %v206
        %215 = vst [vmem:[%s173 + $0x18] sm:$0xff] %v207
        %216 = vst [vmem:[%s173 + $0x20] sm:$0xff] %v208
        %217 = vst [vmem:[%s173 + $0x28] sm:$0xff] %v209
        %218 = vst [vmem:[%s173 + $0x30] sm:$0xff] %v210
        %219 = vst [vmem:[%s173 + $0x38] sm:$0xff] %v211
        %s220 = sand.u32 %s85, 1
        %s221 = scalar_lea.sflag [#allocation6], %s220
        %s222 = sand.u32 %s85, 1
        %s223 = smul.addr %s222, 64
        %s224 = scalar_lea.vmem [#allocation7], %s223
        // Predicated region
        $region29: #{tpu_custom_call.1} parent=23 // pred_check
          %p225 = pneg %p95
        $region30: #{tpu_custom_call.1} parent=23 // pred_check_branch
          %227 = sbr.rel (%p225) target = $region32
        $region31: #{tpu_custom_call.1} parent=23 // pred_region
          %s228 = sld [smem:[#allocation3 + $0x2]]
          %s229 = sadd.s32 %s228, %s32
          %s230 = smul.u32 2, %s31
          %232 = vsyncadd %s221, 0
          %s233 = smul.addr %s230, 32
          %s234 = sadd.s32 %s229, %s233
          %s235 = smul.addr %s234, 8
          %s236 = scalar_lea.hbm %s2, %s235
          %s237 = sshll.u32 %s224, 4
          %s238 = int_to_ptr.vmem [resolvable:$true] %s237
          %s239 = sshll.u32 %s236, 4
          %s240 = int_to_ptr.hbm [resolvable:$true] %s239
          %245 = dma.vmem_to_hbm [thread:$0]  %s238, 1024, %s240, %s221, 128, 1024, 8
        $region32: #{tpu_custom_call.1} parent=23 // pred_fallthru
          _
      $region24: #{tpu_custom_call.1} parent=5 // pred_fallthru
        _
      %p246 = scmp.le.s32.totalorder 2, %s22
      // Predicated region
      $region33: #{tpu_custom_call.1} parent=5 // pred_check
        %p247 = pneg %p246
      $region34: #{tpu_custom_call.1} parent=5 // pred_check_branch
        %249 = sbr.rel (%p247) target = $region36
      $region35: #{tpu_custom_call.1} parent=5 // pred_region
        %s250 = ssub.s32 %s22, 2
        // Predicated region
        $region37: #{tpu_custom_call.1} parent=35 // pred_check
          %p251 = pneg %p101
        $region38: #{tpu_custom_call.1} parent=35 // pred_check_branch
          %253 = sbr.rel (%p251) target = $region40
        $region39: #{tpu_custom_call.1} parent=35 // pred_region
          %s254 = sand.u32 %s86, 1
          %s255 = scalar_lea.sflag [#allocation6], %s254
          %s256 = sand.u32 %s86, 1
          %s257 = smul.addr %s256, 64
          %s258 = scalar_lea.vmem [#allocation7], %s257
          %260 = dma.done %s255, 1024
        $region40: #{tpu_custom_call.1} parent=35 // pred_fallthru
          _
      $region36: #{tpu_custom_call.1} parent=5 // pred_fallthru
        _
    $region6: #{tpu_custom_call.1} parent=1 // loop_footer
      %s26 = sadd.s32 1, %s22
    $region7: #{tpu_custom_call.1} parent=1 // loop_footer_branch
      %21 = sbr.rel target = $region3
    $region8: #{tpu_custom_call.1} parent=1 // loop_exit
      _
    %261 = vsyncpa [#allocation5], 1
    %s262 = scalar_lea.sflag [#allocation5], 1
    %263 = vsyncpa %s262, 1
    %264 = vsyncpa [#allocation6], 1
    %s265 = scalar_lea.sflag [#allocation6], 1
    %266 = vsyncpa %s265, 1

</llo_original>
